<compile_context>
chip_gen: v7x
topology: tpu7x:2x2x1
jax: 0.10.0
libtpu: 0.0.40
codegen_flags: <defaults>
</compile_context>

<pallas_src>
import jax
import jax.numpy as jnp
import numpy as np
from jax.experimental import pallas as pl
from jax.experimental.pallas import tpu as pltpu


def cbam_kernel(x_ref, w1t_ref, w2t_ref, wsa_ref, o_ref, pad_ref):
    Bt, C, L = x_ref.shape
    K = wsa_ref.shape[1]            # conv kernel size (7)
    PAD = (K - 1) // 2              # 3
    f32 = jnp.float32

    x = x_ref[...].astype(f32)                                  # (Bt, C, L)

    # ---------------- Channel attention (batched over the block) -----------
    avg = jnp.mean(x, axis=2)                                   # (Bt, C)
    mx = jnp.max(x, axis=2)                                     # (Bt, C)
    pooled = jnp.concatenate([avg, mx], axis=0)                 # (2*Bt, C)

    # Fused avg/max branches: M = 2*Bt on the MXU's M axis.
    h = jnp.maximum(
        jnp.dot(pooled, w1t_ref[...], preferred_element_type=f32), 0.0)
    z = jnp.dot(h, w2t_ref[...], preferred_element_type=f32)    # (2*Bt, C)
    ca = jax.nn.sigmoid(z[:Bt] + z[Bt:])                        # (Bt, C)

    x1 = x * ca[:, :, None]                                     # channel gate

    # ---------------- Spatial attention (batched over the block) -----------
    s_avg = jnp.mean(x1, axis=1)                                # (Bt, L)
    s_max = jnp.max(x1, axis=1)                                 # (Bt, L)

    # Zero-padded [avg rows; max rows] slab; borders stay zero (Conv1d pad).
    pad_ref[...] = jnp.zeros((2 * Bt, L + K - 1), f32)
    pad_ref[:, PAD:PAD + L] = jnp.concatenate([s_avg, s_max], axis=0)

    # Direct k-tap, pad=PAD Conv1d over the [avg; max] channel pair:
    # 2*K scalar (SMEM) x vector (VPU) multiply-adds on shifted slices,
    # issued once for the whole block.
    logit = jnp.zeros((Bt, L), f32)
    for k in range(K):                                          # static unroll
        logit = (logit
                 + wsa_ref[0, k] * pad_ref[0:Bt, k:k + L]
                 + wsa_ref[1, k] * pad_ref[Bt:2 * Bt, k:k + L])
    sa = jax.nn.sigmoid(logit)                                  # (Bt, L)

    # Single dense store for the whole block.
    o_ref[...] = (x1 * sa[:, None, :]).astype(o_ref.dtype)


def _device_params():
    """Generation-aware block-size / VMEM policy."""
    kind = ""
    try:
        kind = jax.devices()[0].device_kind.lower()
    except Exception:
        pass
    if ("v5 lite" in kind) or ("v5e" in kind) or ("v5litepod" in kind):
        # Single TensorCore, 16 MiB default scoped VMEM: no >=2-step rule,
        # keep the pipeline footprint comfortably under the scoped limit.
        return {"pipeline_budget": 10 << 20, "min_steps": 1,
                "step_multiple": 1, "vmem_limit": None}
    if "v7" in kind:
        # 2 TCs share the parallel grid axis; 64 MiB VMEM per TC -> even step
        # counts and <=~24 MiB pipeline footprint per core.
        return {"pipeline_budget": 24 << 20, "min_steps": 2,
                "step_multiple": 2, "vmem_limit": 32 << 20}
    # v6e (and default): HBM-bandwidth bound -> larger blocks, raised limit.
    return {"pipeline_budget": 48 << 20, "min_steps": 2,
            "step_multiple": 1, "vmem_limit": 64 << 20}


def _pick_block_batch(B, C, L, params):
    """Largest Bt dividing B such that the double-buffered (in + out) blocks
    fit the generation's pipeline budget and the grid-step constraints hold."""
    per_sample = C * L * 4                                  # f32 bytes / sample
    cap = max(1, params["pipeline_budget"] // (4 * per_sample))  # 2 bufs x (in+out)
    divisors = [d for d in range(1, B + 1) if B % d == 0]

    def ok(d):
        steps = B // d
        return (d <= cap
                and steps >= params["min_steps"]
                and steps % params["step_multiple"] == 0)

    good = [d for d in divisors if ok(d)]
    if good:
        return max(good)
    fitting = [d for d in divisors if d <= cap]
    return max(fitting) if fitting else 1


@jax.jit
def cbam_pallas(x, w1, w2, w_sa):
    B, C, L = x.shape
    Cr = w1.shape[0]
    K = w_sa.shape[2]

    params = _device_params()
    Bt = _pick_block_batch(B, C, L, params)

    w1t = jnp.transpose(w1).astype(jnp.float32)             # (C, Cr)
    w2t = jnp.transpose(w2).astype(jnp.float32)             # (Cr, C)
    wsa2 = w_sa[0].astype(jnp.float32)                      # (2, K) conv taps

    flops = B * (8 * C * Cr + 6 * C * L + 4 * K * L)
    transcendentals = B * (C + L)                            # sigmoids
    bytes_accessed = 4 * (2 * B * C * L + 2 * C * Cr + 2 * K)

    return pl.pallas_call(
        cbam_kernel,
        out_shape=jax.ShapeDtypeStruct((B, C, L), x.dtype),
        grid=(B // Bt,),
        in_specs=[
            pl.BlockSpec((Bt, C, L), lambda g: (g, 0, 0)),
            pl.BlockSpec((C, Cr), lambda g: (0, 0)),
            pl.BlockSpec((Cr, C), lambda g: (0, 0)),
            pl.BlockSpec(memory_space=pltpu.MemorySpace.SMEM),   # (2, K) taps
        ],
        out_specs=pl.BlockSpec((Bt, C, L), lambda g: (g, 0, 0)),
        scratch_shapes=[
            pltpu.VMEM((2 * Bt, L + K - 1), jnp.float32),  # padded [avg;max] slab
        ],
        compiler_params=pltpu.CompilerParams(
            dimension_semantics=("parallel",),
            vmem_limit_bytes=params["vmem_limit"]),
        cost_estimate=pl.CostEstimate(flops=flops,
                                      transcendentals=transcendentals,
                                      bytes_accessed=bytes_accessed),
    )(x, w1t, w2t, wsa2)


def cbam_ref(x, w1, w2, w_sa):
    """Pure-JAX reference matching the PyTorch CBAM forward (all convs bias=False)."""
    avg = jnp.mean(x, axis=2, keepdims=True)
    mx = jnp.max(x, axis=2, keepdims=True)

    def mlp(v):
        h = jnp.maximum(jnp.einsum('oc,bcl->bol', w1, v), 0.0)
        return jnp.einsum('co,bol->bcl', w2, h)

    ca = jax.nn.sigmoid(mlp(avg) + mlp(mx))
    x1 = x * ca
    s_avg = jnp.mean(x1, axis=1, keepdims=True)
    s_max = jnp.max(x1, axis=1, keepdims=True)
    cat = jnp.concatenate([s_avg, s_max], axis=1)            # (B, 2, L)
    sa_logit = jax.lax.conv_general_dilated(
        cat, w_sa, window_strides=(1,), padding=((3, 3),),
        dimension_numbers=('NCH', 'OIH', 'NCH'))
    sa = jax.nn.sigmoid(sa_logit)
    return x1 * sa


if __name__ == "__main__":
    B, C, L, ratio = 2, 32, 16, 16       # C must be >= ratio (Conv1d(C, C//16, 1))
    Cr = C // ratio

    key = jax.random.PRNGKey(0)
    kx, k1, k2, k3 = jax.random.split(key, 4)
    x = jax.random.normal(kx, (B, C, L), dtype=jnp.float32)
    # PyTorch shapes: fc1 (Cr,C,1), fc2 (C,Cr,1), spatial conv (1,2,7);
    # the trailing kernel-size-1 dims are dropped for fc1/fc2.
    w1 = 0.2 * jax.random.normal(k1, (Cr, C), dtype=jnp.float32)
    w2 = 0.2 * jax.random.normal(k2, (C, Cr), dtype=jnp.float32)
    w_sa = 0.2 * jax.random.normal(k3, (1, 2, 7), dtype=jnp.float32)

    out = jax.block_until_ready(cbam_pallas(x, w1, w2, w_sa))
    ref = jax.block_until_ready(cbam_ref(x, w1, w2, w_sa))

    assert out.shape == (B, C, L) and out.dtype == x.dtype
    np.testing.assert_allclose(np.asarray(out), np.asarray(ref), rtol=1e-4, atol=1e-4)
    print("KERNEL_OK")
</pallas_src>

<mosaic_0001>
module attributes {stable_mosaic.version = 11 : i64} {
  func.func @cbam_kernel(%arg0: i32, %arg1: memref<1x32x16xf32, #tpu.memory_space<vmem>>, %arg2: memref<32x2xf32, #tpu.memory_space<vmem>>, %arg3: memref<2x32xf32, #tpu.memory_space<vmem>>, %arg4: memref<2x7xf32, #tpu.memory_space<smem>>, %arg5: memref<1x32x16xf32, #tpu.memory_space<vmem>>, %arg6: memref<2x22xf32, #tpu.memory_space<vmem>>) attributes {dimension_semantics = [#tpu.dimension_semantics<parallel>], iteration_bounds = array<i64: 2>, scalar_prefetch = 0 : i64, scratch_operands = 1 : i64, tpu.core_type = #tpu.core_type<tc>, window_params = [{transform_indices = @transform_0, window_bounds = array<i64: 1, 32, 16>}, {pipeline_mode = #tpu.pipeline_mode<synchronous>, transform_indices = @transform_1, window_bounds = array<i64: 32, 2>}, {pipeline_mode = #tpu.pipeline_mode<synchronous>, transform_indices = @transform_2, window_bounds = array<i64: 2, 32>}, {transform_indices = @transform_3, window_bounds = array<i64: 2, 7>}, {transform_indices = @transform_4, window_bounds = array<i64: 1, 32, 16>}]} {
    %c0 = arith.constant 0 : index
    %c0_0 = arith.constant 0 : index
    %c0_1 = arith.constant 0 : index
    %0 = vector.load %arg1[%c0, %c0_0, %c0_1] : memref<1x32x16xf32, #tpu.memory_space<vmem>>, vector<1x32x16xf32>
    %cst = arith.constant dense<0.000000e+00> : vector<1x32xf32>
    %1 = vector.multi_reduction <add>, %0, %cst [2] : vector<1x32x16xf32> to vector<1x32xf32>
    %cst_2 = arith.constant 1.600000e+01 : f32
    %2 = vector.broadcast %cst_2 : f32 to vector<1x32xf32>
    %3 = arith.divf %1, %2 : vector<1x32xf32>
    %cst_3 = arith.constant dense<0xFF800000> : vector<1x32xf32>
    %4 = vector.multi_reduction <maximumf>, %0, %cst_3 [2] : vector<1x32x16xf32> to vector<1x32xf32>
    %5 = tpu.concatenate %3, %4 in 0 : vector<1x32xf32>, vector<1x32xf32> -> vector<2x32xf32>
    %c0_4 = arith.constant 0 : index
    %c0_5 = arith.constant 0 : index
    %6 = vector.load %arg2[%c0_4, %c0_5] : memref<32x2xf32, #tpu.memory_space<vmem>>, vector<32x2xf32>
    %cst_6 = arith.constant dense<0.000000e+00> : vector<2x2xf32>
    %7 = tpu.matmul %5, %6, %cst_6 {dimension_numbers = #tpu.dot_dimension_numbers<[1], [0], [0], [1], [0, 0, 1, 1], [], []>} : vector<2x32xf32>, vector<32x2xf32>, vector<2x2xf32> -> vector<2x2xf32>
    %cst_7 = arith.constant 0.000000e+00 : f32
    %8 = vector.broadcast %cst_7 : f32 to vector<2x2xf32>
    %9 = arith.maximumf %7, %8 : vector<2x2xf32>
    %c0_8 = arith.constant 0 : index
    %c0_9 = arith.constant 0 : index
    %10 = vector.load %arg3[%c0_8, %c0_9] : memref<2x32xf32, #tpu.memory_space<vmem>>, vector<2x32xf32>
    %cst_10 = arith.constant dense<0.000000e+00> : vector<2x32xf32>
    %11 = tpu.matmul %9, %10, %cst_10 {dimension_numbers = #tpu.dot_dimension_numbers<[1], [0], [0], [1], [0, 0, 1, 1], [], []>} : vector<2x2xf32>, vector<2x32xf32>, vector<2x32xf32> -> vector<2x32xf32>
    %12 = vector.extract_strided_slice %11 {offsets = [0, 0], sizes = [1, 32], strides = [1, 1]} : vector<2x32xf32> to vector<1x32xf32>
    %13 = vector.extract_strided_slice %11 {offsets = [1, 0], sizes = [1, 32], strides = [1, 1]} : vector<2x32xf32> to vector<1x32xf32>
    %14 = arith.addf %12, %13 : vector<1x32xf32>
    %15 = arith.negf %14 : vector<1x32xf32>
    %16 = math.exp %15 : vector<1x32xf32>
    %cst_11 = arith.constant 1.000000e+00 : f32
    %17 = vector.broadcast %cst_11 : f32 to vector<1x32xf32>
    %18 = arith.addf %17, %16 : vector<1x32xf32>
    %19 = arith.divf %17, %18 : vector<1x32xf32>
    %20 = vector.shape_cast %19 : vector<1x32xf32> to vector<1x32x1xf32>
    %21 = vector.broadcast %20 : vector<1x32x1xf32> to vector<1x32x16xf32>
    %22 = arith.mulf %0, %21 : vector<1x32x16xf32>
    %cst_12 = arith.constant dense<0.000000e+00> : vector<1x16xf32>
    %23 = vector.multi_reduction <add>, %22, %cst_12 [1] : vector<1x32x16xf32> to vector<1x16xf32>
    %cst_13 = arith.constant 3.200000e+01 : f32
    %24 = vector.broadcast %cst_13 : f32 to vector<1x16xf32>
    %25 = arith.divf %23, %24 : vector<1x16xf32>
    %cst_14 = arith.constant dense<0xFF800000> : vector<1x16xf32>
    %26 = vector.multi_reduction <maximumf>, %22, %cst_14 [1] : vector<1x32x16xf32> to vector<1x16xf32>
    %cst_15 = arith.constant 0.000000e+00 : f32
    %27 = vector.broadcast %cst_15 : f32 to vector<2x22xf32>
    %c0_16 = arith.constant 0 : index
    %c0_17 = arith.constant 0 : index
    %28 = vector.load %arg6[%c0_16, %c0_17] : memref<2x22xf32, #tpu.memory_space<vmem>>, vector<2x22xf32>
    tpu.vector_store %arg6[%c0_16, %c0_17], %27 {strides = array<i32>} : memref<2x22xf32, #tpu.memory_space<vmem>>, vector<2x22xf32>,
    %29 = tpu.concatenate %25, %26 in 0 : vector<1x16xf32>, vector<1x16xf32> -> vector<2x16xf32>
    %c0_18 = arith.constant 0 : index
    %c3 = arith.constant 3 : index
    %30 = vector.load %arg6[%c0_18, %c3] : memref<2x22xf32, #tpu.memory_space<vmem>>, vector<2x16xf32>
    tpu.vector_store %arg6[%c0_18, %c3], %29 {strides = array<i32>} : memref<2x22xf32, #tpu.memory_space<vmem>>, vector<2x16xf32>,
    %cst_19 = arith.constant 0.000000e+00 : f32
    %31 = vector.broadcast %cst_19 : f32 to vector<1x16xf32>
    %c0_20 = arith.constant 0 : index
    %c0_21 = arith.constant 0 : index
    %32 = memref.load %arg4[%c0_20, %c0_21] : memref<2x7xf32, #tpu.memory_space<smem>>
    %c0_22 = arith.constant 0 : index
    %c0_23 = arith.constant 0 : index
    %33 = vector.load %arg6[%c0_22, %c0_23] : memref<2x22xf32, #tpu.memory_space<vmem>>, vector<1x16xf32>
    %34 = vector.broadcast %32 : f32 to vector<1x16xf32>
    %35 = arith.mulf %34, %33 : vector<1x16xf32>
    %36 = arith.addf %31, %35 : vector<1x16xf32>
    %c1 = arith.constant 1 : index
    %c0_24 = arith.constant 0 : index
    %37 = memref.load %arg4[%c1, %c0_24] : memref<2x7xf32, #tpu.memory_space<smem>>
    %c1_25 = arith.constant 1 : index
    %c0_26 = arith.constant 0 : index
    %38 = vector.load %arg6[%c1_25, %c0_26] : memref<2x22xf32, #tpu.memory_space<vmem>>, vector<1x16xf32>
    %39 = vector.broadcast %37 : f32 to vector<1x16xf32>
    %40 = arith.mulf %39, %38 : vector<1x16xf32>
    %41 = arith.addf %36, %40 : vector<1x16xf32>
    %c0_27 = arith.constant 0 : index
    %c1_28 = arith.constant 1 : index
    %42 = memref.load %arg4[%c0_27, %c1_28] : memref<2x7xf32, #tpu.memory_space<smem>>
    %c0_29 = arith.constant 0 : index
    %c1_30 = arith.constant 1 : index
    %43 = vector.load %arg6[%c0_29, %c1_30] : memref<2x22xf32, #tpu.memory_space<vmem>>, vector<1x16xf32>
    %44 = vector.broadcast %42 : f32 to vector<1x16xf32>
    %45 = arith.mulf %44, %43 : vector<1x16xf32>
    %46 = arith.addf %41, %45 : vector<1x16xf32>
    %c1_31 = arith.constant 1 : index
    %c1_32 = arith.constant 1 : index
    %47 = memref.load %arg4[%c1_31, %c1_32] : memref<2x7xf32, #tpu.memory_space<smem>>
    %c1_33 = arith.constant 1 : index
    %c1_34 = arith.constant 1 : index
    %48 = vector.load %arg6[%c1_33, %c1_34] : memref<2x22xf32, #tpu.memory_space<vmem>>, vector<1x16xf32>
    %49 = vector.broadcast %47 : f32 to vector<1x16xf32>
    %50 = arith.mulf %49, %48 : vector<1x16xf32>
    %51 = arith.addf %46, %50 : vector<1x16xf32>
    %c0_35 = arith.constant 0 : index
    %c2 = arith.constant 2 : index
    %52 = memref.load %arg4[%c0_35, %c2] : memref<2x7xf32, #tpu.memory_space<smem>>
    %c0_36 = arith.constant 0 : index
    %c2_37 = arith.constant 2 : index
    %53 = vector.load %arg6[%c0_36, %c2_37] : memref<2x22xf32, #tpu.memory_space<vmem>>, vector<1x16xf32>
    %54 = vector.broadcast %52 : f32 to vector<1x16xf32>
    %55 = arith.mulf %54, %53 : vector<1x16xf32>
    %56 = arith.addf %51, %55 : vector<1x16xf32>
    %c1_38 = arith.constant 1 : index
    %c2_39 = arith.constant 2 : index
    %57 = memref.load %arg4[%c1_38, %c2_39] : memref<2x7xf32, #tpu.memory_space<smem>>
    %c1_40 = arith.constant 1 : index
    %c2_41 = arith.constant 2 : index
    %58 = vector.load %arg6[%c1_40, %c2_41] : memref<2x22xf32, #tpu.memory_space<vmem>>, vector<1x16xf32>
    %59 = vector.broadcast %57 : f32 to vector<1x16xf32>
    %60 = arith.mulf %59, %58 : vector<1x16xf32>
    %61 = arith.addf %56, %60 : vector<1x16xf32>
    %c0_42 = arith.constant 0 : index
    %c3_43 = arith.constant 3 : index
    %62 = memref.load %arg4[%c0_42, %c3_43] : memref<2x7xf32, #tpu.memory_space<smem>>
    %c0_44 = arith.constant 0 : index
    %c3_45 = arith.constant 3 : index
    %63 = vector.load %arg6[%c0_44, %c3_45] : memref<2x22xf32, #tpu.memory_space<vmem>>, vector<1x16xf32>
    %64 = vector.broadcast %62 : f32 to vector<1x16xf32>
    %65 = arith.mulf %64, %63 : vector<1x16xf32>
    %66 = arith.addf %61, %65 : vector<1x16xf32>
    %c1_46 = arith.constant 1 : index
    %c3_47 = arith.constant 3 : index
    %67 = memref.load %arg4[%c1_46, %c3_47] : memref<2x7xf32, #tpu.memory_space<smem>>
    %c1_48 = arith.constant 1 : index
    %c3_49 = arith.constant 3 : index
    %68 = vector.load %arg6[%c1_48, %c3_49] : memref<2x22xf32, #tpu.memory_space<vmem>>, vector<1x16xf32>
    %69 = vector.broadcast %67 : f32 to vector<1x16xf32>
    %70 = arith.mulf %69, %68 : vector<1x16xf32>
    %71 = arith.addf %66, %70 : vector<1x16xf32>
    %c0_50 = arith.constant 0 : index
    %c4 = arith.constant 4 : index
    %72 = memref.load %arg4[%c0_50, %c4] : memref<2x7xf32, #tpu.memory_space<smem>>
    %c0_51 = arith.constant 0 : index
    %c4_52 = arith.constant 4 : index
    %73 = vector.load %arg6[%c0_51, %c4_52] : memref<2x22xf32, #tpu.memory_space<vmem>>, vector<1x16xf32>
    %74 = vector.broadcast %72 : f32 to vector<1x16xf32>
    %75 = arith.mulf %74, %73 : vector<1x16xf32>
    %76 = arith.addf %71, %75 : vector<1x16xf32>
    %c1_53 = arith.constant 1 : index
    %c4_54 = arith.constant 4 : index
    %77 = memref.load %arg4[%c1_53, %c4_54] : memref<2x7xf32, #tpu.memory_space<smem>>
    %c1_55 = arith.constant 1 : index
    %c4_56 = arith.constant 4 : index
    %78 = vector.load %arg6[%c1_55, %c4_56] : memref<2x22xf32, #tpu.memory_space<vmem>>, vector<1x16xf32>
    %79 = vector.broadcast %77 : f32 to vector<1x16xf32>
    %80 = arith.mulf %79, %78 : vector<1x16xf32>
    %81 = arith.addf %76, %80 : vector<1x16xf32>
    %c0_57 = arith.constant 0 : index
    %c5 = arith.constant 5 : index
    %82 = memref.load %arg4[%c0_57, %c5] : memref<2x7xf32, #tpu.memory_space<smem>>
    %c0_58 = arith.constant 0 : index
    %c5_59 = arith.constant 5 : index
    %83 = vector.load %arg6[%c0_58, %c5_59] : memref<2x22xf32, #tpu.memory_space<vmem>>, vector<1x16xf32>
    %84 = vector.broadcast %82 : f32 to vector<1x16xf32>
    %85 = arith.mulf %84, %83 : vector<1x16xf32>
    %86 = arith.addf %81, %85 : vector<1x16xf32>
    %c1_60 = arith.constant 1 : index
    %c5_61 = arith.constant 5 : index
    %87 = memref.load %arg4[%c1_60, %c5_61] : memref<2x7xf32, #tpu.memory_space<smem>>
    %c1_62 = arith.constant 1 : index
    %c5_63 = arith.constant 5 : index
    %88 = vector.load %arg6[%c1_62, %c5_63] : memref<2x22xf32, #tpu.memory_space<vmem>>, vector<1x16xf32>
    %89 = vector.broadcast %87 : f32 to vector<1x16xf32>
    %90 = arith.mulf %89, %88 : vector<1x16xf32>
    %91 = arith.addf %86, %90 : vector<1x16xf32>
    %c0_64 = arith.constant 0 : index
    %c6 = arith.constant 6 : index
    %92 = memref.load %arg4[%c0_64, %c6] : memref<2x7xf32, #tpu.memory_space<smem>>
    %c0_65 = arith.constant 0 : index
    %c6_66 = arith.constant 6 : index
    %93 = vector.load %arg6[%c0_65, %c6_66] : memref<2x22xf32, #tpu.memory_space<vmem>>, vector<1x16xf32>
    %94 = vector.broadcast %92 : f32 to vector<1x16xf32>
    %95 = arith.mulf %94, %93 : vector<1x16xf32>
    %96 = arith.addf %91, %95 : vector<1x16xf32>
    %c1_67 = arith.constant 1 : index
    %c6_68 = arith.constant 6 : index
    %97 = memref.load %arg4[%c1_67, %c6_68] : memref<2x7xf32, #tpu.memory_space<smem>>
    %c1_69 = arith.constant 1 : index
    %c6_70 = arith.constant 6 : index
    %98 = vector.load %arg6[%c1_69, %c6_70] : memref<2x22xf32, #tpu.memory_space<vmem>>, vector<1x16xf32>
    %99 = vector.broadcast %97 : f32 to vector<1x16xf32>
    %100 = arith.mulf %99, %98 : vector<1x16xf32>
    %101 = arith.addf %96, %100 : vector<1x16xf32>
    %102 = arith.negf %101 : vector<1x16xf32>
    %103 = math.exp %102 : vector<1x16xf32>
    %cst_71 = arith.constant 1.000000e+00 : f32
    %104 = vector.broadcast %cst_71 : f32 to vector<1x16xf32>
    %105 = arith.addf %104, %103 : vector<1x16xf32>
    %106 = arith.divf %104, %105 : vector<1x16xf32>
    %107 = vector.shape_cast %106 : vector<1x16xf32> to vector<1x1x16xf32>
    %108 = vector.broadcast %107 : vector<1x1x16xf32> to vector<1x32x16xf32>
    %109 = arith.mulf %22, %108 : vector<1x32x16xf32>
    %c0_72 = arith.constant 0 : index
    %c0_73 = arith.constant 0 : index
    %c0_74 = arith.constant 0 : index
    %110 = vector.load %arg5[%c0_72, %c0_73, %c0_74] : memref<1x32x16xf32, #tpu.memory_space<vmem>>, vector<1x32x16xf32>
    tpu.vector_store %arg5[%c0_72, %c0_73, %c0_74], %109 {strides = array<i32>} : memref<1x32x16xf32, #tpu.memory_space<vmem>>, vector<1x32x16xf32>,
    return
  }
  func.func @transform_0(%arg0: i32) -> (i32, i32, i32) {
    %c0_i32 = arith.constant 0 : i32
    %c0_i32_0 = arith.constant 0 : i32
    %c0_i32_1 = arith.constant 0 : i32
    return %arg0, %c0_i32, %c0_i32_0 : i32, i32, i32
  }
  func.func @transform_1(%arg0: i32) -> (i32, i32) {
    %c0_i32 = arith.constant 0 : i32
    %c0_i32_0 = arith.constant 0 : i32
    %c0_i32_1 = arith.constant 0 : i32
    return %c0_i32, %c0_i32_0 : i32, i32
  }
  func.func @transform_2(%arg0: i32) -> (i32, i32) {
    %c0_i32 = arith.constant 0 : i32
    %c0_i32_0 = arith.constant 0 : i32
    %c0_i32_1 = arith.constant 0 : i32
    return %c0_i32, %c0_i32_0 : i32, i32
  }
  func.func @transform_3(%arg0: i32) -> (i32, i32) {
    %c0_i32 = arith.constant 0 : i32
    %c0_i32_0 = arith.constant 0 : i32
    %c0_i32_1 = arith.constant 0 : i32
    return %c0_i32, %c0_i32_0 : i32, i32
  }
  func.func @transform_4(%arg0: i32) -> (i32, i32, i32) {
    %c0_i32 = arith.constant 0 : i32
    %c0_i32_0 = arith.constant 0 : i32
    %c0_i32_1 = arith.constant 0 : i32
    return %arg0, %c0_i32, %c0_i32_0 : i32, i32, i32
  }
}

</mosaic_0001>

<llo_original>
// kernel: cbam_pallas.1
$region0: #{cbam_pallas.1}
  #allocation0 [shape = 'u32[]', space=smem, size = 0x4, offset = 0x4, fixed_abs, tag = 'smem constant byte address 0x4 - core index']
  #allocation1 [shape = 'u32[144,128]{1,0:T(1,128)}', space=vmem, size = 0x12000, scoped, tag = 'internal scratch']
  #allocation2 [shape = 'f32[2,22]{1,0:T(2,128)}', space=vmem, size = 0x400, scoped, tag = 'scratch operand']
  %s0 = inlined_call_operand.hbm [shape: f32[2,32,16], index: 0, kind: input, shape index: {}]
  %s1 = inlined_call_operand.hbm [shape: f32[32,2], index: 1, kind: input, shape index: {}]
  %s2 = inlined_call_operand.hbm [shape: f32[2,32], index: 2, kind: input, shape index: {}]
  %s3 = inlined_call_operand.hbm [shape: f32[2,7], index: 3, kind: input, shape index: {}]
  %s4 = inlined_call_operand.hbm [shape: f32[2,32,16], index: 4, kind: output, shape index: {}]
  %s5 = sld [smem:[#allocation0]]
  $region65: #{cbam_pallas.1} parent=0
    _
  %s7 = ssub.s32 1, %s5
  %s8 = scalar_select 0, %s7, %s5
  $region1: #{cbam_pallas.1} parent=0
    #allocation3 [shape = 'u8[32768]{0}', space=vmem, size = 0x8000, scoped, tag = 'input window, operand 0']
    #allocation4 [shape = 's32[2]{0}', space=sflag, size = 0x8, scoped, tag = 'scoped memory for cbam_pallas.1']
    #allocation5 [shape = 's32[2]{0}', space=sflag, size = 0x8, scoped, tag = 'scoped memory for cbam_pallas.1']
    #allocation6 [shape = 's32[2]{0}', space=sflag, size = 0x8, scoped, tag = 'scoped memory for cbam_pallas.1']
    #allocation7 [shape = 'u8[16384]{0}', space=vmem, size = 0x4000, scoped, tag = 'input window, operand 1, single buffered']
    #allocation8 [shape = 's32[1]{0}', space=sflag, size = 0x4, scoped, tag = 'scoped memory for cbam_pallas.1']
    #allocation9 [shape = 'u8[1024]{0}', space=vmem, size = 0x400, scoped, tag = 'input window, operand 2, single buffered']
    #allocation10 [shape = 'u8[1024]{0}', space=smem, size = 0x400, scoped, tag = 'input window, operand 3, single buffered']
    #allocation11 [shape = 'u8[32768]{0}', space=vmem, size = 0x8000, scoped, tag = 'output window, operand 0']
    %9 = vsyncpa [#allocation4], 0
    %s10 = scalar_lea.sflag [#allocation4], 1
    %11 = vsyncpa %s10, 0
    %12 = vsyncpa [#allocation8], 0
    %13 = vsyncpa [#allocation6], 0
    %14 = vsyncpa [#allocation5], 0
    %s15 = scalar_lea.sflag [#allocation5], 1
    %16 = vsyncpa %s15, 0
    loop: start=0, step=1, limit=4
    $region2: #{cbam_pallas.1} parent=1 // loop_pre_header
      _
    $region3: #{cbam_pallas.1} parent=1 // loop_header
      %s18 = sphi 0, %s22
      %p19 = scmp.ge.s32.totalorder %s18, 4
      %s28 = sphi 0, %s30
      %s31 = sphi 0, %s28
      %s32 = sphi 0, %s31
      %s48 = sphi 0, %s32
      %s52 = sphi 0, %s52
      %s54 = sphi 0, %s52
      %s55 = sphi 0, %s54
      %s69 = sphi 0, %s55
      %s73 = sphi 0, %s73
      %s75 = sphi 0, %s73
      %s76 = sphi 0, %s75
      %s90 = sphi 0, %s76
      %s94 = sphi 0, %s94
      %s96 = sphi 0, %s94
      %s97 = sphi 0, %s96
      %s111 = sphi 0, %s97
      %s117 = sphi 0, %s119
      %s120 = sphi 0, %s117
      %s121 = sphi 0, %s120
      %s137 = sphi 0, %s121
    $region4: #{cbam_pallas.1} parent=1 // loop_header_branch
      %21 = sbr.rel (%p19) target = $region8
    $region5: #{cbam_pallas.1} parent=1 // loop_body
      %s23 = ssub.s32 %s18, 1
      %s24 = ssub.s32 %s18, 2
      %s25 = sadd.s32 %s18, 1
      %s26 = ssub.s32 %s18, %s25
      %p27 = scmp.eq.s32.totalorder %s26, 0
      %s29 = sadd.s32 %s28, 1
      %s30 = scalar_select %p27, %s28, %s29
      %p33 = pneg %p27
      %p34 = scmp.eq.s32.totalorder %s18, 1
      %p35 = por %p33, %p34
      %p36 = scmp.ne.s32.totalorder %s28, %s31
      %p37 = scmp.eq.s32.totalorder %s18, 0
      %p38 = por %p36, %p37
      %p39 = scmp.ne.s32.totalorder %s28, %s31
      %p40 = scmp.eq.s32.totalorder %s23, 1
      %p41 = por %p39, %p40
      %p42 = scmp.ne.s32.totalorder %s31, %s32
      %p43 = scmp.eq.s32.totalorder %s23, 0
      %p44 = por %p42, %p43
      %p45 = scmp.ne.s32.totalorder %s31, %s32
      %p46 = scmp.eq.s32.totalorder %s24, 1
      %p47 = por %p45, %p46
      %p49 = scmp.ne.s32.totalorder %s32, %s48
      %p50 = scmp.eq.s32.totalorder %s24, 0
      %p51 = por %p49, %p50
      %s53 = sadd.s32 %s52, 1
      %p56 = scmp.eq.s32.totalorder %s18, 1
      %p57 = scmp.ne.s32.totalorder %s52, %s54
      %p58 = scmp.eq.s32.totalorder %s18, 0
      %p59 = por %p57, %p58
      %p60 = scmp.ne.s32.totalorder %s52, %s54
      %p61 = scmp.eq.s32.totalorder %s23, 1
      %p62 = por %p60, %p61
      %p63 = scmp.ne.s32.totalorder %s54, %s55
      %p64 = scmp.eq.s32.totalorder %s23, 0
      %p65 = por %p63, %p64
      %p66 = scmp.ne.s32.totalorder %s54, %s55
      %p67 = scmp.eq.s32.totalorder %s24, 1
      %p68 = por %p66, %p67
      %p70 = scmp.ne.s32.totalorder %s55, %s69
      %p71 = scmp.eq.s32.totalorder %s24, 0
      %p72 = por %p70, %p71
      %s74 = sadd.s32 %s73, 1
      %p77 = scmp.eq.s32.totalorder %s18, 1
      %p78 = scmp.ne.s32.totalorder %s73, %s75
      %p79 = scmp.eq.s32.totalorder %s18, 0
      %p80 = por %p78, %p79
      %p81 = scmp.ne.s32.totalorder %s73, %s75
      %p82 = scmp.eq.s32.totalorder %s23, 1
      %p83 = por %p81, %p82
      %p84 = scmp.ne.s32.totalorder %s75, %s76
      %p85 = scmp.eq.s32.totalorder %s23, 0
      %p86 = por %p84, %p85
      %p87 = scmp.ne.s32.totalorder %s75, %s76
      %p88 = scmp.eq.s32.totalorder %s24, 1
      %p89 = por %p87, %p88
      %p91 = scmp.ne.s32.totalorder %s76, %s90
      %p92 = scmp.eq.s32.totalorder %s24, 0
      %p93 = por %p91, %p92
      %s95 = sadd.s32 %s94, 1
      %p98 = scmp.eq.s32.totalorder %s18, 1
      %p99 = scmp.ne.s32.totalorder %s94, %s96
      %p100 = scmp.eq.s32.totalorder %s18, 0
      %p101 = por %p99, %p100
      %p102 = scmp.ne.s32.totalorder %s94, %s96
      %p103 = scmp.eq.s32.totalorder %s23, 1
      %p104 = por %p102, %p103
      %p105 = scmp.ne.s32.totalorder %s96, %s97
      %p106 = scmp.eq.s32.totalorder %s23, 0
      %p107 = por %p105, %p106
      %p108 = scmp.ne.s32.totalorder %s96, %s97
      %p109 = scmp.eq.s32.totalorder %s24, 1
      %p110 = por %p108, %p109
      %p112 = scmp.ne.s32.totalorder %s97, %s111
      %p113 = scmp.eq.s32.totalorder %s24, 0
      %p114 = por %p112, %p113
      %s115 = ssub.s32 %s18, %s25
      %p116 = scmp.eq.s32.totalorder %s115, 0
      %s118 = sadd.s32 %s117, 1
      %s119 = scalar_select %p116, %s117, %s118
      %p122 = pneg %p116
      %p123 = scmp.eq.s32.totalorder %s18, 1
      %p124 = por %p122, %p123
      %p125 = scmp.ne.s32.totalorder %s117, %s120
      %p126 = scmp.eq.s32.totalorder %s18, 0
      %p127 = por %p125, %p126
      %p128 = scmp.ne.s32.totalorder %s117, %s120
      %p129 = scmp.eq.s32.totalorder %s23, 1
      %p130 = por %p128, %p129
      %p131 = scmp.ne.s32.totalorder %s120, %s121
      %p132 = scmp.eq.s32.totalorder %s23, 0
      %p133 = por %p131, %p132
      %p134 = scmp.ne.s32.totalorder %s120, %s121
      %p135 = scmp.eq.s32.totalorder %s24, 1
      %p136 = por %p134, %p135
      %p138 = scmp.ne.s32.totalorder %s121, %s137
      %p139 = scmp.eq.s32.totalorder %s24, 0
      %p140 = por %p138, %p139
      %p141 = scmp.le.s32.totalorder 1, %s18
      %p142 = scmp.lt.s32.totalorder %s18, 3
      %p143 = pnand %p141, %p142
      %p144 = pneg %p143
      // Predicated region
      $region9: #{cbam_pallas.1} parent=5 // pred_check
        _
      $region10: #{cbam_pallas.1} parent=5 // pred_check_branch
        %146 = sbr.rel (%p143) target = $region12
      $region11: #{cbam_pallas.1} parent=5 // pred_region
        %s147 = ssub.s32 %s18, 1
        // Predicated region
        $region13: #{cbam_pallas.1} parent=11 // pred_check
          %p148 = pneg %p65
        $region14: #{cbam_pallas.1} parent=11 // pred_check_branch
          %150 = sbr.rel (%p148) target = $region16
        $region15: #{cbam_pallas.1} parent=11 // pred_region
          %s152 = ssub.s32 512, 512
          %153 = vsyncadd [#allocation8], %s152
          %s154 = sshll.u32 [#allocation7], 4
          %s155 = int_to_ptr.vmem [resolvable:$true] %s154
          %160 = dma.hbm_to_vmem [thread:$0]  %s1, 512, %s155, [#allocation8], 128, 128, 8
        $region16: #{cbam_pallas.1} parent=11 // pred_fallthru
          _
        // Predicated region
        $region17: #{cbam_pallas.1} parent=11 // pred_check
          %p161 = pneg %p86
        $region18: #{cbam_pallas.1} parent=11 // pred_check_branch
          %163 = sbr.rel (%p161) target = $region20
        $region19: #{cbam_pallas.1} parent=11 // pred_region
          %s165 = ssub.s32 32, 32
          %166 = vsyncadd [#allocation8], %s165
          %s168 = sshll.u32 [#allocation9], 4
          %s169 = int_to_ptr.vmem [resolvable:$true] %s168
          %171 = dma.hbm_to_vmem [thread:$0]  %s2, 32, %s169, [#allocation8]
        $region20: #{cbam_pallas.1} parent=11 // pred_fallthru
          _
        // Predicated region
        $region21: #{cbam_pallas.1} parent=11 // pred_check
          %p172 = pneg %p107
        $region22: #{cbam_pallas.1} parent=11 // pred_check_branch
          %174 = sbr.rel (%p172) target = $region24
        $region23: #{cbam_pallas.1} parent=11 // pred_region
          %s176 = ssub.s32 32, 32
          %177 = vsyncadd [#allocation6], %s176
          %180 = dma.hbm_to_smem %s3, 32, [#allocation10], [#allocation6]
        $region24: #{cbam_pallas.1} parent=11 // pred_fallthru
          _
      $region12: #{cbam_pallas.1} parent=5 // pred_fallthru
        _
      %p181 = scmp.lt.s32.totalorder %s18, 2
      // Predicated region
      $region25: #{cbam_pallas.1} parent=5 // pred_check
        %p182 = pneg %p181
      $region26: #{cbam_pallas.1} parent=5 // pred_check_branch
        %184 = sbr.rel (%p182) target = $region28
      $region27: #{cbam_pallas.1} parent=5 // pred_region
        // Predicated region
        $region29: #{cbam_pallas.1} parent=27 // pred_check
          %p185 = pneg %p38
        $region30: #{cbam_pallas.1} parent=27 // pred_check_branch
          %187 = sbr.rel (%p185) target = $region32
        $region31: #{cbam_pallas.1} parent=27 // pred_region
          %s188 = sand.u32 %s28, 1
          %s189 = scalar_lea.sflag [#allocation4], %s188
          %s190 = sand.u32 %s28, 1
          %s191 = smul.addr %s190, 32
          %s192 = scalar_lea.vmem [#allocation3], %s191
          %s194 = ssub.s32 512, 512
          %195 = vsyncadd %s189, %s194
          %s196 = smul.addr %s18, 4
          %s197 = smul.addr %s196, 128
          %s198 = scalar_lea.hbm %s0, %s197
          %s199 = sshll.u32 %s192, 4
          %s200 = int_to_ptr.vmem [resolvable:$true] %s199
          %205 = dma.hbm_to_vmem [thread:$0]  %s198, 512, %s200, %s189, 128, 128, 8
        $region32: #{cbam_pallas.1} parent=27 // pred_fallthru
          _
      $region28: #{cbam_pallas.1} parent=5 // pred_fallthru
        _
      %p206 = scmp.le.s32.totalorder 1, %s18
      %p207 = scmp.lt.s32.totalorder %s18, 3
      %p208 = pnand %p206, %p207
      %p209 = pneg %p208
      // Predicated region
      $region33: #{cbam_pallas.1} parent=5 // pred_check
        _
      $region34: #{cbam_pallas.1} parent=5 // pred_check_branch
        %211 = sbr.rel (%p208) target = $region36
      $region35: #{cbam_pallas.1} parent=5 // pred_region
        %s212 = ssub.s32 %s18, 1
        %s213 = sand.u32 %s31, 1
        %s214 = scalar_lea.sflag [#allocation4], %s213
        %s215 = sand.u32 %s31, 1
        %s216 = smul.addr %s215, 32
        %s217 = scalar_lea.vmem [#allocation3], %s216
        // Predicated region
        $region37: #{cbam_pallas.1} parent=35 // pred_check
          %p218 = pneg %p44
        $region38: #{cbam_pallas.1} parent=35 // pred_check_branch
          %220 = sbr.rel (%p218) target = $region40
        $region39: #{cbam_pallas.1} parent=35 // pred_region
          %221 = dma.done %s214, 512
        $region40: #{cbam_pallas.1} parent=35 // pred_fallthru
          _
        // Predicated region
        $region41: #{cbam_pallas.1} parent=35 // pred_check
          %p222 = pneg %p65
        $region42: #{cbam_pallas.1} parent=35 // pred_check_branch
          %224 = sbr.rel (%p222) target = $region44
        $region43: #{cbam_pallas.1} parent=35 // pred_region
          %225 = dma.done [#allocation8], 512
        $region44: #{cbam_pallas.1} parent=35 // pred_fallthru
          _
        // Predicated region
        $region45: #{cbam_pallas.1} parent=35 // pred_check
          %p226 = pneg %p86
        $region46: #{cbam_pallas.1} parent=35 // pred_check_branch
          %228 = sbr.rel (%p226) target = $region48
        $region47: #{cbam_pallas.1} parent=35 // pred_region
          %229 = dma.done [#allocation8], 32
        $region48: #{cbam_pallas.1} parent=35 // pred_fallthru
          _
        // Predicated region
        $region49: #{cbam_pallas.1} parent=35 // pred_check
          %p230 = pneg %p107
        $region50: #{cbam_pallas.1} parent=35 // pred_check_branch
          %232 = sbr.rel (%p230) target = $region52
        $region51: #{cbam_pallas.1} parent=35 // pred_region
          %233 = dma.done [#allocation6], 32
        $region52: #{cbam_pallas.1} parent=35 // pred_fallthru
          _
        %234 = sfence
        %s235 = sand.u32 %s31, 1
        %s236 = scalar_lea.sflag [#allocation4], %s235
        %s237 = sand.u32 %s31, 1
        %s238 = smul.addr %s237, 32
        %s239 = scalar_lea.vmem [#allocation3], %s238
        %p240 = pneg %p44
        %p241 = pneg %p41
        %p242 = pneg %p65
        %p243 = pneg %p62
        %p244 = pneg %p86
        %p245 = pneg %p83
        %p246 = pneg %p107
        %p247 = pneg %p104
        %p248 = pneg %p133
        %p249 = pneg %p130
        %s250 = sand.u32 %s120, 1
        %s251 = scalar_lea.sflag [#allocation5], %s250
        %s252 = sand.u32 %s120, 1
        %s253 = smul.addr %s252, 32
        %s254 = scalar_lea.vmem [#allocation11], %s253
        %v255 = vld [vmem:[%s217] sm:$0xff]
        %v256 = vld [vmem:[%s217 + $0x8] sm:$0xff]
        %v257 = vld [vmem:[%s217 + $0x10] sm:$0xff]
        %v258 = vld [vmem:[%s217 + $0x18] sm:$0xff]
        %vm259 = vcmask 130048
        %v260 = vsel %vm259, %v255, 0.0
        %261 = vadd.xlane.f32.xlu0 %v260
        %v262 = vpop.xlane.xlu0 %261
        %v263 = vsel %vm259, %v256, 0.0
        %264 = vadd.xlane.f32.xlu0 %v263
        %v265 = vpop.xlane.xlu0 %264
        %v266 = vsel %vm259, %v257, 0.0
        %267 = vadd.xlane.f32.xlu0 %v266
        %v268 = vpop.xlane.xlu0 %267
        %v269 = vsel %vm259, %v258, 0.0
        %270 = vadd.xlane.f32.xlu0 %v269
        %v271 = vpop.xlane.xlu0 %270
        %v272 = vrcp.pop 16.0
        %v273 = vmul.f32 %v262, %v272
        %v274 = vmul.f32 %v265, %v272
        %v275 = vmul.f32 %v268, %v272
        %v276 = vmul.f32 %v271, %v272
        %v277 = vsel %vm259, %v255, -inf
        %278 = vmax.xlane.f32.xlu0 %v277
        %v279 = vpop.xlane.xlu0 %278
        %v280 = vsel %vm259, %v256, -inf
        %281 = vmax.xlane.f32.xlu0 %v280
        %v282 = vpop.xlane.xlu0 %281
        %v283 = vsel %vm259, %v257, -inf
        %284 = vmax.xlane.f32.xlu0 %v283
        %v285 = vpop.xlane.xlu0 %284
        %v286 = vsel %vm259, %v258, -inf
        %287 = vmax.xlane.f32.xlu0 %v286
        %v288 = vpop.xlane.xlu0 %287
        %v293 = vlaneseq
        %v294 = vand.u32 %v293, 127
        %v295 = vlaneseq
        %v296 = vshrl.u32 %v295, 7
        %v297 = vsub.s32 %v294, %v296
        %v298 = vrot.slane %v273, %v297
        %v299 = vadd.s32 %v294, 4294967288
        %v300 = vlaneseq
        %v301 = vshrl.u32 %v300, 7
        %v302 = vsub.s32 %v299, %v301
        %v303 = vrot.slane %v274, %v302
        %vm304 = vcmask 130112
        %v305 = vsel %vm304, %v303, %v298
        %v306 = vadd.s32 %v294, 4294967280
        %v307 = vlaneseq
        %v308 = vshrl.u32 %v307, 7
        %v309 = vsub.s32 %v306, %v308
        %v310 = vrot.slane %v275, %v309
        %vm311 = vcmask 195712
        %v312 = vsel %vm311, %v310, %v305
        %v313 = vadd.s32 %v294, 4294967272
        %v314 = vlaneseq
        %v315 = vshrl.u32 %v314, 7
        %v316 = vsub.s32 %v313, %v315
        %v317 = vrot.slane %v276, %v316
        %vm318 = vcmask 261312
        %v319 = vsel %vm318, %v317, %v312
        %v325 = vlaneseq
        %v326 = vshrl.u32 %v325, 7
        %v327 = vsub.s32 %v294, %v326
        %v328 = vrot.slane %v279, %v327
        %v329 = vlaneseq
        %v330 = vshrl.u32 %v329, 7
        %v331 = vsub.s32 %v299, %v330
        %v332 = vrot.slane %v282, %v331
        %v333 = vsel %vm304, %v332, %v328
        %v334 = vlaneseq
        %v335 = vshrl.u32 %v334, 7
        %v336 = vsub.s32 %v306, %v335
        %v337 = vrot.slane %v285, %v336
        %v338 = vsel %vm311, %v337, %v333
        %v339 = vlaneseq
        %v340 = vshrl.u32 %v339, 7
        %v341 = vsub.s32 %v313, %v340
        %v342 = vrot.slane %v288, %v341
        %v343 = vsel %vm318, %v342, %v338
        %vm345 = vcmask 1040384
        %v346 = vsel %vm345, %v319, %v343
        %v347 = vld [vmem:[#allocation7] sm:$0xff]
        %v348 = vld [vmem:[#allocation7 + $0x8] sm:$0xff]
        %v349 = vld [vmem:[#allocation7 + $0x10] sm:$0xff]
        %v350 = vld [vmem:[#allocation7 + $0x18] sm:$0xff]
        %vm351 = vcmask 261120
        %v353 = vsel %vm351, %v346, 0
        %355 = vmatprep.subr.mxu0 0.0
        %356 = vmatpush1.msra.mxu0 %v347
        %357 = vmatprep.subr.mxu0 0.0
        %358 = vmatpush1.msra.mxu0 %v348
        %359 = vmatprep.subr.mxu0 0.0
        %360 = vmatpush1.msra.mxu0 %v349
        %361 = vmatprep.subr.mxu0 0.0
        %362 = vmatpush1.msra.mxu0 %v350
        %363 = vmatprep.subr.mxu0 0.0
        %364 = vmatpush1.msra.mxu0 0.0
        %365 = vmatprep.subr.mxu0 0.0
        %366 = vmatpush1.msra.mxu0 0.0
        %367 = vmatprep.subr.mxu0 0.0
        %368 = vmatpush1.msra.mxu0 0.0
        %369 = vmatprep.subr.mxu0 0.0
        %370 = vmatpush1.msra.mxu0 0.0
        %371 = vmatprep.subr.mxu0 0.0
        %372 = vmatpush1.msra.mxu0 0.0
        %373 = vmatprep.subr.mxu0 0.0
        %374 = vmatpush1.msra.mxu0 0.0
        %375 = vmatprep.subr.mxu0 0.0
        %376 = vmatpush1.msra.mxu0 0.0
        %377 = vmatprep.subr.mxu0 0.0
        %378 = vmatpush1.msra.mxu0 0.0
        %379 = vmatprep.subr.mxu0 0.0
        %380 = vmatpush1.msra.mxu0 0.0
        %381 = vmatprep.subr.mxu0 0.0
        %382 = vmatpush1.msra.mxu0 0.0
        %383 = vmatprep.subr.mxu0 0.0
        %384 = vmatpush1.msra.mxu0 0.0
        %385 = vmatprep.subr.mxu0 0.0
        %386 = vmatpush1.msra.mxu0 0.0
        %387 = vmatprep.subr.mxu0 0.0
        %388 = vmatpush1.msra.mxu0 0.0
        %389 = vmatprep.subr.mxu0 0.0
        %390 = vmatpush1.msra.mxu0 0.0
        %391 = vmatprep.subr.mxu0 0.0
        %392 = vmatpush1.msra.mxu0 0.0
        %393 = vmatprep.subr.mxu0 0.0
        %394 = vmatpush1.msra.mxu0 0.0
        %395 = vmatprep.subr.mxu0 0.0
        %396 = vmatpush1.msra.mxu0 0.0
        %397 = vmatprep.subr.mxu0 0.0
        %398 = vmatpush1.msra.mxu0 0.0
        %399 = vmatprep.subr.mxu0 0.0
        %400 = vmatpush1.msra.mxu0 0.0
        %401 = vmatprep.subr.mxu0 0.0
        %402 = vmatpush1.msra.mxu0 0.0
        %403 = vmatprep.subr.mxu0 0.0
        %404 = vmatpush1.msra.mxu0 0.0
        %405 = vmatprep.subr.mxu0 0.0
        %406 = vmatpush1.msra.mxu0 0.0
        %407 = vmatprep.subr.mxu0 0.0
        %408 = vmatpush1.msra.mxu0 0.0
        %409 = vmatprep.subr.mxu0 0.0
        %410 = vmatpush1.msra.mxu0 0.0
        %411 = vmatprep.subr.mxu0 0.0
        %412 = vmatpush1.msra.mxu0 0.0
        %413 = vmatprep.subr.mxu0 0.0
        %414 = vmatpush1.msra.mxu0 0.0
        %415 = vmatprep.subr.mxu0 0.0
        %416 = vmatpush1.msra.mxu0 0.0
        %417 = vmatprep.subr.mxu0 0.0
        %418 = vmatpush1.msra.mxu0 0.0
        %419 = vmatprep.mubr.f32.mxu0 0.0
        %420 = vmatmul.mubr.f32.gmra.mrb[0].mxu0 %v353
        %v421 = vpop.f32.mrb[0].mxu0
        %v422 = vadd.f32 0.0, %v421
        %v423 = vpop.f32.mrb[0].mxu0
        %424 = vdwg.mxu0
        %v425 = vmax.f32 %v422, 0.0
        %v426 = vld [vmem:[#allocation9] sm:$0x3]
        %vm427 = vcmask 15360
        %v429 = vsel %vm427, %v425, 0
        %vm431 = vcmask 1041408
        %v433 = vsel %vm431, %v426, 0
        %435 = vmatprep.subr.mxu0 0.0
        %436 = vmatpush1.msra.mxu0 %v433
        %437 = vmatprep.subr.mxu0 0.0
        %438 = vmatpush1.msra.mxu0 0.0
        %439 = vmatprep.subr.mxu0 0.0
        %440 = vmatpush1.msra.mxu0 0.0
        %441 = vmatprep.subr.mxu0 0.0
        %442 = vmatpush1.msra.mxu0 0.0
        %443 = vmatprep.subr.mxu0 0.0
        %444 = vmatpush1.msra.mxu0 0.0
        %445 = vmatprep.subr.mxu0 0.0
        %446 = vmatpush1.msra.mxu0 0.0
        %447 = vmatprep.subr.mxu0 0.0
        %448 = vmatpush1.msra.mxu0 0.0
        %449 = vmatprep.subr.mxu0 0.0
        %450 = vmatpush1.msra.mxu0 0.0
        %451 = vmatprep.subr.mxu0 0.0
        %452 = vmatpush1.msra.mxu0 0.0
        %453 = vmatprep.subr.mxu0 0.0
        %454 = vmatpush1.msra.mxu0 0.0
        %455 = vmatprep.subr.mxu0 0.0
        %456 = vmatpush1.msra.mxu0 0.0
        %457 = vmatprep.subr.mxu0 0.0
        %458 = vmatpush1.msra.mxu0 0.0
        %459 = vmatprep.subr.mxu0 0.0
        %460 = vmatpush1.msra.mxu0 0.0
        %461 = vmatprep.subr.mxu0 0.0
        %462 = vmatpush1.msra.mxu0 0.0
        %463 = vmatprep.subr.mxu0 0.0
        %464 = vmatpush1.msra.mxu0 0.0
        %465 = vmatprep.subr.mxu0 0.0
        %466 = vmatpush1.msra.mxu0 0.0
        %467 = vmatprep.subr.mxu0 0.0
        %468 = vmatpush1.msra.mxu0 0.0
        %469 = vmatprep.subr.mxu0 0.0
        %470 = vmatpush1.msra.mxu0 0.0
        %471 = vmatprep.subr.mxu0 0.0
        %472 = vmatpush1.msra.mxu0 0.0
        %473 = vmatprep.subr.mxu0 0.0
        %474 = vmatpush1.msra.mxu0 0.0
        %475 = vmatprep.subr.mxu0 0.0
        %476 = vmatpush1.msra.mxu0 0.0
        %477 = vmatprep.subr.mxu0 0.0
        %478 = vmatpush1.msra.mxu0 0.0
        %479 = vmatprep.subr.mxu0 0.0
        %480 = vmatpush1.msra.mxu0 0.0
        %481 = vmatprep.subr.mxu0 0.0
        %482 = vmatpush1.msra.mxu0 0.0
        %483 = vmatprep.subr.mxu0 0.0
        %484 = vmatpush1.msra.mxu0 0.0
        %485 = vmatprep.subr.mxu0 0.0
        %486 = vmatpush1.msra.mxu0 0.0
        %487 = vmatprep.subr.mxu0 0.0
        %488 = vmatpush1.msra.mxu0 0.0
        %489 = vmatprep.subr.mxu0 0.0
        %490 = vmatpush1.msra.mxu0 0.0
        %491 = vmatprep.subr.mxu0 0.0
        %492 = vmatpush1.msra.mxu0 0.0
        %493 = vmatprep.subr.mxu0 0.0
        %494 = vmatpush1.msra.mxu0 0.0
        %495 = vmatprep.subr.mxu0 0.0
        %496 = vmatpush1.msra.mxu0 0.0
        %497 = vmatprep.subr.mxu0 0.0
        %498 = vmatpush1.msra.mxu0 0.0
        %499 = vmatprep.mubr.f32.mxu0 0.0
        %500 = vmatmul.mubr.f32.gmra.mrb[0].mxu0 %v429
        %v501 = vpop.f32.mrb[0].mxu0
        %v502 = vadd.f32 0.0, %v501
        %v503 = vpop.f32.mrb[0].mxu0
        %504 = vdwg.mxu0
        %v506 = vrot.slane %v502, 1
        %v508 = vadd.f32 %v502, %v506
        %v509 = vxor.u32 %v508, 2147483648
        %v510 = vmul.f32 %v509, 1.442695
        %v511 = vpow.pop %v510
        %v512 = vadd.f32 %v511, 1.0
        %v513 = vrcp.pop %v512
        %v514 = vmul.f32 1.0, %v513
        %v515 = vlaneseq
        %v516 = vshrl.u32 %v515, 7
        %v517 = vsub.s32 0, %v516
        %v518 = vrot.slane %v514, %v517
        %520 = vbcast.lane.b32.xlu0 %v518, 256
        %v521 = vpop.permute.xlu0 %520
        %s523 = sor.u32 256, 8
        %524 = vbcast.lane.b32.xlu0 %v518, %s523
        %v525 = vpop.permute.xlu0 %524
        %s527 = sor.u32 256, 16
        %528 = vbcast.lane.b32.xlu0 %v518, %s527
        %v529 = vpop.permute.xlu0 %528
        %s531 = sor.u32 256, 24
        %532 = vbcast.lane.b32.xlu0 %v518, %s531
        %v533 = vpop.permute.xlu0 %532
        %v534 = vmul.f32 %v255, %v521
        %v535 = vmul.f32 %v256, %v525
        %v536 = vmul.f32 %v257, %v529
        %v537 = vmul.f32 %v258, %v533
        %v538 = vsel %vm259, %v534, 0.0
        %v539 = vsel %vm259, %v535, 0.0
        %v540 = vadd.f32 %v538, %v539
        %v541 = vsel %vm259, %v536, 0.0
        %v542 = vadd.f32 %v540, %v541
        %v543 = vsel %vm259, %v537, 0.0
        %v544 = vadd.f32 %v542, %v543
        %v545 = vrot.slane %v544, 4
        %v546 = vadd.f32 %v544, %v545
        %v547 = vrot.slane %v546, 2
        %v548 = vadd.f32 %v546, %v547
        %v549 = vrot.slane %v548, 1
        %v550 = vadd.f32 %v548, %v549
        %v551 = vrcp.pop 32.0
        %v552 = vmul.f32 %v550, %v551
        %v553 = vsel %vm259, %v534, -inf
        %v554 = vsel %vm259, %v535, -inf
        %v555 = vsel %vm259, %v536, -inf
        %v556 = vsel %vm259, %v537, -inf
        %v557 = vmax.f32 %v553, %v554
        %v558 = vmax.f32 %v555, %v556
        %v559 = vmax.f32 %v557, %v558
        %v560 = vrot.slane %v559, 4
        %v561 = vmax.f32 %v559, %v560
        %v562 = vrot.slane %v561, 2
        %v563 = vmax.f32 %v561, %v562
        %v564 = vrot.slane %v563, 1
        %v565 = vmax.f32 %v563, %v564
        %vm566 = vcmask 173056
        %567 = vst.msk [vmem:[#allocation2] sm:$0x3] %vm566, 0.0
        %v568 = vsel %vm345, %v552, %v565
        %570 = vrot.lane.b32.xlu0 %v568, 3
        %v571 = vpop.permute.xlu0 %570
        %vm573 = vcmask 148504
        %574 = vst.msk [vmem:[#allocation2] sm:$0x3] %vm573, %v571
        %s575 = sld [smem:[#allocation10]]
        %v576 = vld [vmem:[#allocation2] sm:$0x1]
        %v577 = vstv %s575
        %v578 = vmul.f32 %v577, %v576
        %v579 = vadd.f32 %v578, 0.0
        %s580 = sld [smem:[#allocation10 + $0x80]]
        %v581 = vld [vmem:[#allocation2 + $0x1] sm:$0x1]
        %v582 = vstv %s580
        %v583 = vmul.f32 %v582, %v581
        %v584 = vadd.f32 %v579, %v583
        %s585 = sld [smem:[#allocation10 + $0x1]]
        %v586 = vstv %s585
        %v587 = vmul.f32 %v586, %v576
        %589 = vrot.lane.b32.xlu0 %v587, 127
        %v590 = vpop.permute.xlu0 %589
        %v592 = vadd.f32 %v584, %v590
        %s593 = sld [smem:[#allocation10 + $0x81]]
        %v594 = vstv %s593
        %v595 = vmul.f32 %v594, %v581
        %597 = vrot.lane.b32.xlu0 %v595, 127
        %v598 = vpop.permute.xlu0 %597
        %v600 = vadd.f32 %v592, %v598
        %s601 = sld [smem:[#allocation10 + $0x2]]
        %v602 = vstv %s601
        %v603 = vmul.f32 %v602, %v576
        %605 = vrot.lane.b32.xlu0 %v603, 126
        %v606 = vpop.permute.xlu0 %605
        %v608 = vadd.f32 %v600, %v606
        %s609 = sld [smem:[#allocation10 + $0x82]]
        %v610 = vstv %s609
        %v611 = vmul.f32 %v610, %v581
        %613 = vrot.lane.b32.xlu0 %v611, 126
        %v614 = vpop.permute.xlu0 %613
        %v616 = vadd.f32 %v608, %v614
        %s617 = sld [smem:[#allocation10 + $0x3]]
        %v618 = vstv %s617
        %v619 = vmul.f32 %v618, %v576
        %621 = vrot.lane.b32.xlu0 %v619, 125
        %v622 = vpop.permute.xlu0 %621
        %v624 = vadd.f32 %v616, %v622
        %s625 = sld [smem:[#allocation10 + $0x83]]
        %v626 = vstv %s625
        %v627 = vmul.f32 %v626, %v581
        %629 = vrot.lane.b32.xlu0 %v627, 125
        %v630 = vpop.permute.xlu0 %629
        %v632 = vadd.f32 %v624, %v630
        %s633 = sld [smem:[#allocation10 + $0x4]]
        %v634 = vstv %s633
        %v635 = vmul.f32 %v634, %v576
        %637 = vrot.lane.b32.xlu0 %v635, 124
        %v638 = vpop.permute.xlu0 %637
        %v640 = vadd.f32 %v632, %v638
        %s641 = sld [smem:[#allocation10 + $0x84]]
        %v642 = vstv %s641
        %v643 = vmul.f32 %v642, %v581
        %645 = vrot.lane.b32.xlu0 %v643, 124
        %v646 = vpop.permute.xlu0 %645
        %v648 = vadd.f32 %v640, %v646
        %s649 = sld [smem:[#allocation10 + $0x5]]
        %v650 = vstv %s649
        %v651 = vmul.f32 %v650, %v576
        %653 = vrot.lane.b32.xlu0 %v651, 123
        %v654 = vpop.permute.xlu0 %653
        %v656 = vadd.f32 %v648, %v654
        %s657 = sld [smem:[#allocation10 + $0x85]]
        %v658 = vstv %s657
        %v659 = vmul.f32 %v658, %v581
        %661 = vrot.lane.b32.xlu0 %v659, 123
        %v662 = vpop.permute.xlu0 %661
        %v664 = vadd.f32 %v656, %v662
        %s665 = sld [smem:[#allocation10 + $0x6]]
        %v666 = vstv %s665
        %v667 = vmul.f32 %v666, %v576
        %669 = vrot.lane.b32.xlu0 %v667, 122
        %v670 = vpop.permute.xlu0 %669
        %v672 = vadd.f32 %v664, %v670
        %s673 = sld [smem:[#allocation10 + $0x86]]
        %v674 = vstv %s673
        %v675 = vmul.f32 %v674, %v581
        %677 = vrot.lane.b32.xlu0 %v675, 122
        %v678 = vpop.permute.xlu0 %677
        %v680 = vadd.f32 %v672, %v678
        %v681 = vxor.u32 %v680, 2147483648
        %v682 = vmul.f32 %v681, 1.442695
        %v683 = vpow.pop %v682
        %v684 = vadd.f32 %v683, 1.0
        %v685 = vrcp.pop %v684
        %v686 = vmul.f32 1.0, %v685
        %v687 = vlaneseq
        %v688 = vshrl.u32 %v687, 7
        %v689 = vsub.s32 0, %v688
        %v690 = vrot.slane %v686, %v689
        %v691 = vmul.f32 %v534, %v690
        %v692 = vmul.f32 %v535, %v690
        %v693 = vmul.f32 %v536, %v690
        %v694 = vmul.f32 %v537, %v690
        %695 = vst.msk [vmem:[%s254] sm:$0xff] %vm259, %v691
        %696 = vst.msk [vmem:[%s254 + $0x8] sm:$0xff] %vm259, %v692
        %697 = vst.msk [vmem:[%s254 + $0x10] sm:$0xff] %vm259, %v693
        %698 = vst.msk [vmem:[%s254 + $0x18] sm:$0xff] %vm259, %v694
        %s699 = sand.u32 %s120, 1
        %s700 = scalar_lea.sflag [#allocation5], %s699
        %s701 = sand.u32 %s120, 1
        %s702 = smul.addr %s701, 32
        %s703 = scalar_lea.vmem [#allocation11], %s702
        // Predicated region
        $region53: #{cbam_pallas.1} parent=35 // pred_check
          %p704 = pneg %p130
        $region54: #{cbam_pallas.1} parent=35 // pred_check_branch
          %706 = sbr.rel (%p704) target = $region56
        $region55: #{cbam_pallas.1} parent=35 // pred_region
          %s708 = ssub.s32 512, 512
          %709 = vsyncadd %s700, %s708
          %s710 = smul.addr %s23, 4
          %s711 = smul.addr %s710, 128
          %s712 = scalar_lea.hbm %s4, %s711
          %s713 = sshll.u32 %s703, 4
          %s714 = int_to_ptr.vmem [resolvable:$true] %s713
          %719 = dma.vmem_to_hbm [thread:$0]  %s714, 512, %s712, %s700, 128, 128, 8
        $region56: #{cbam_pallas.1} parent=35 // pred_fallthru
          _
      $region36: #{cbam_pallas.1} parent=5 // pred_fallthru
        _
      %p720 = scmp.le.s32.totalorder 2, %s18
      // Predicated region
      $region57: #{cbam_pallas.1} parent=5 // pred_check
        %p721 = pneg %p720
      $region58: #{cbam_pallas.1} parent=5 // pred_check_branch
        %723 = sbr.rel (%p721) target = $region60
      $region59: #{cbam_pallas.1} parent=5 // pred_region
        %s724 = ssub.s32 %s18, 2
        // Predicated region
        $region61: #{cbam_pallas.1} parent=59 // pred_check
          %p725 = pneg %p136
        $region62: #{cbam_pallas.1} parent=59 // pred_check_branch
          %727 = sbr.rel (%p725) target = $region64
        $region63: #{cbam_pallas.1} parent=59 // pred_region
          %s728 = sand.u32 %s121, 1
          %s729 = scalar_lea.sflag [#allocation5], %s728
          %s730 = sand.u32 %s121, 1
          %s731 = smul.addr %s730, 32
          %s732 = scalar_lea.vmem [#allocation11], %s731
          %733 = dma.done %s729, 512
        $region64: #{cbam_pallas.1} parent=59 // pred_fallthru
          _
      $region60: #{cbam_pallas.1} parent=5 // pred_fallthru
        _
    $region6: #{cbam_pallas.1} parent=1 // loop_footer
      %s22 = sadd.s32 1, %s18
    $region7: #{cbam_pallas.1} parent=1 // loop_footer_branch
      %17 = sbr.rel target = $region3
    $region8: #{cbam_pallas.1} parent=1 // loop_exit
      _
    %734 = vsyncpa [#allocation4], 1
    %s735 = scalar_lea.sflag [#allocation4], 1
    %736 = vsyncpa %s735, 1
    %737 = vsyncpa [#allocation8], 1
    %738 = vsyncpa [#allocation5], 1
    %s739 = scalar_lea.sflag [#allocation5], 1
    %740 = vsyncpa %s739, 1
    %741 = vsyncpa [#allocation6], 1
    %s742 = scalar_lea.sflag [#allocation6], 1
    %743 = vsyncpa %s742, 1

</llo_original>
